<compile_context>
chip_gen: v7x
topology: tpu7x:2x2x1
jax: 0.10.0
libtpu: 0.0.40
codegen_flags: <defaults>
</compile_context>

<pallas_src>
import jax
import jax.numpy as jnp
from jax.experimental import pallas as pl
from jax.experimental.pallas import tpu as pltpu

# ----------------------------- configuration --------------------------------
NUM_COVARIATES = 32      # config.data.num_covariates
N_FEATURES     = 256     # FCNN encoder hidden width
NUM_CONCEPTS   = 8       # config.data.num_concepts
NUM_CLASSES    = 4       # config.data.num_classes (>2 -> pred_dim = num_classes)
PRED_DIM       = NUM_CLASSES
OUT_LANES      = 128     # lane-dense output slab width
BATCH          = 8


# ------------------------------- Pallas kernel ------------------------------
def cbm_soft_kernel(x_ref,
                    w0_ref, b0_ref,      # encoder layer 0: (D_in, H) bf16, (1, H) f32
                    w1_ref, b1_ref,      # encoder layer 1: (H, H)    bf16, (1, H) f32
                    w2_ref, b2_ref,      # encoder layer 2: (H, H)    bf16, (1, H) f32
                    wout_ref, bout_ref,  # fused concept+head: (H, 128) bf16, (1, 128) f32
                    out_ref):            # (TB, 128) f32 lane-dense output slab
    # ---- FCNN encoder: Linear + ReLU x 3 (bf16 matmul operands, f32 math) ----
    h = jnp.dot(x_ref[...], w0_ref[...], preferred_element_type=jnp.float32)
    h = jnp.maximum(h + b0_ref[...], 0.0)
    h = jnp.dot(h.astype(jnp.bfloat16), w1_ref[...], preferred_element_type=jnp.float32)
    h = jnp.maximum(h + b1_ref[...], 0.0)
    h = jnp.dot(h.astype(jnp.bfloat16), w2_ref[...], preferred_element_type=jnp.float32)
    h = jnp.maximum(h + b2_ref[...], 0.0)

    # ---- fused concept predictor + linear head: one (TB,256)@(256,128) matmul ----
    # lanes [0:C)        -> c_logit  (sigmoid -> c_prob)
    # lanes [C:C+P)      -> y_logits (head folded onto c_logit, exact since head is linear)
    # lanes [C+P:128)    -> zero padding
    z = jnp.dot(h.astype(jnp.bfloat16), wout_ref[...], preferred_element_type=jnp.float32)
    z = z + bout_ref[...]

    lane = jax.lax.broadcasted_iota(jnp.int32, z.shape, dimension=1)
    out_ref[...] = jnp.where(lane < NUM_CONCEPTS, jax.nn.sigmoid(z), z)


# ------------------------------- wrapper -------------------------------------
def _round_up(n, m):
    return ((n + m - 1) // m) * m


@jax.jit
def cbm_forward(x, params):
    """Soft-CBM forward. Returns (c_prob, y_pred_logits, c)."""
    B = x.shape[0]
    TB = 128 if B > 128 else _round_up(max(B, 1), 8)   # batch tile (sublane-aligned)
    B_pad = _round_up(B, TB)

    # --- fold the linear head into the concept projection (exact, head is linear) ---
    wc, bc = params["wc"], params["bc"]          # (H, C), (1, C)
    wy, by = params["wy"], params["by"]          # (C, P), (1, P)
    wy_fused = wc @ wy                            # (H, P)
    by_fused = bc @ wy + by                       # (1, P)

    w_out = jnp.zeros((N_FEATURES, OUT_LANES), jnp.float32)
    w_out = w_out.at[:, :NUM_CONCEPTS].set(wc)
    w_out = w_out.at[:, NUM_CONCEPTS:NUM_CONCEPTS + PRED_DIM].set(wy_fused)
    b_out = jnp.zeros((1, OUT_LANES), jnp.float32)
    b_out = b_out.at[:, :NUM_CONCEPTS].set(bc)
    b_out = b_out.at[:, NUM_CONCEPTS:NUM_CONCEPTS + PRED_DIM].set(by_fused)

    # --- bf16 matmul operands (halves weight DMA, native MXU path); biases stay f32 ---
    x_p = jnp.zeros((B_pad, NUM_COVARIATES), jnp.bfloat16).at[:B].set(x.astype(jnp.bfloat16))
    w0 = params["w0"].astype(jnp.bfloat16)
    w1 = params["w1"].astype(jnp.bfloat16)
    w2 = params["w2"].astype(jnp.bfloat16)
    w_out_b = w_out.astype(jnp.bfloat16)

    const_map = lambda i: (0, 0)   # weights/biases: DMA'd once, VMEM-resident across tiles
    batch_map = lambda i: (i, 0)

    flops = 2 * B_pad * (NUM_COVARIATES * N_FEATURES
                         + 2 * N_FEATURES * N_FEATURES
                         + N_FEATURES * OUT_LANES)
    bytes_accessed = (
        x_p.size * 2
        + (w0.size + w1.size + w2.size + w_out_b.size) * 2
        + (params["b0"].size + params["b1"].size + params["b2"].size + b_out.size) * 4
        + B_pad * OUT_LANES * 4)

    out = pl.pallas_call(
        cbm_soft_kernel,
        out_shape=jax.ShapeDtypeStruct((B_pad, OUT_LANES), jnp.float32),
        grid=(B_pad // TB,),
        in_specs=[
            pl.BlockSpec((TB, NUM_COVARIATES), batch_map),
            pl.BlockSpec((NUM_COVARIATES, N_FEATURES), const_map),
            pl.BlockSpec((1, N_FEATURES), const_map),
            pl.BlockSpec((N_FEATURES, N_FEATURES), const_map),
            pl.BlockSpec((1, N_FEATURES), const_map),
            pl.BlockSpec((N_FEATURES, N_FEATURES), const_map),
            pl.BlockSpec((1, N_FEATURES), const_map),
            pl.BlockSpec((N_FEATURES, OUT_LANES), const_map),
            pl.BlockSpec((1, OUT_LANES), const_map),
        ],
        out_specs=pl.BlockSpec((TB, OUT_LANES), batch_map),
        compiler_params=pltpu.CompilerParams(
            dimension_semantics=("parallel",)),
        cost_estimate=pl.CostEstimate(
            flops=flops,
            transcendentals=B_pad * OUT_LANES,
            bytes_accessed=bytes_accessed),
    )(x_p, w0, params["b0"], w1, params["b1"], w2, params["b2"], w_out_b, b_out)

    c_prob = out[:B, :NUM_CONCEPTS]
    y_pred_logits = out[:B, NUM_CONCEPTS:NUM_CONCEPTS + PRED_DIM]
    c = jnp.zeros_like(c_prob)   # torch.empty_like(c_prob) stand-in
    return c_prob, y_pred_logits, c


# --------------------------- pure-JAX f32 reference ---------------------------
def cbm_forward_ref(x, params):
    h = jnp.maximum(x @ params["w0"] + params["b0"], 0.0)
    h = jnp.maximum(h @ params["w1"] + params["b1"], 0.0)
    h = jnp.maximum(h @ params["w2"] + params["b2"], 0.0)
    c_logit = h @ params["wc"] + params["bc"]
    c_prob = jax.nn.sigmoid(c_logit)
    y = c_logit @ params["wy"] + params["by"]
    return c_prob, y


# --------------------------- parameter initialization ------------------------
def init_params(key):
    """Deterministic PyTorch-style init: U(-1/sqrt(fan_in), 1/sqrt(fan_in))."""
    def linear(key, fan_in, fan_out):
        kw, kb = jax.random.split(key)
        bound = 1.0 / jnp.sqrt(fan_in)
        w = jax.random.uniform(kw, (fan_in, fan_out), jnp.float32, -bound, bound)
        b = jax.random.uniform(kb, (1, fan_out), jnp.float32, -bound, bound)
        return w, b

    keys = jax.random.split(key, 5)
    w0, b0 = linear(keys[0], NUM_COVARIATES, N_FEATURES)
    w1, b1 = linear(keys[1], N_FEATURES, N_FEATURES)
    w2, b2 = linear(keys[2], N_FEATURES, N_FEATURES)
    wc, bc = linear(keys[3], N_FEATURES, NUM_CONCEPTS)
    wy, by = linear(keys[4], NUM_CONCEPTS, PRED_DIM)
    return dict(w0=w0, b0=b0, w1=w1, b1=b1, w2=w2, b2=b2,
                wc=wc, bc=bc, wy=wy, by=by)


# ------------------------------------ main -----------------------------------
if __name__ == "__main__":
    key = jax.random.PRNGKey(0)
    k_x, k_p = jax.random.split(key)

    x = jax.random.normal(k_x, (BATCH, NUM_COVARIATES), dtype=jnp.float32)
    params = init_params(k_p)

    c_prob, y_pred_logits, c = cbm_forward(x, params)
    jax.block_until_ready((c_prob, y_pred_logits, c))

    # shape / sanity checks
    assert c_prob.shape == (BATCH, NUM_CONCEPTS)
    assert y_pred_logits.shape == (BATCH, PRED_DIM)
    assert c.shape == (BATCH, NUM_CONCEPTS)
    assert bool(jnp.all((c_prob >= 0.0) & (c_prob <= 1.0)))
    assert bool(jnp.all(jnp.isfinite(y_pred_logits)))

    # loose correctness check vs pure-JAX f32 reference (bf16 matmul operands)
    c_prob_ref, y_ref = cbm_forward_ref(x, params)
    assert bool(jnp.allclose(c_prob, c_prob_ref, atol=5e-2, rtol=5e-2))
    assert bool(jnp.allclose(y_pred_logits, y_ref, atol=5e-2, rtol=5e-2))

    print("KERNEL_OK")
</pallas_src>

<mosaic_0001>
module attributes {stable_mosaic.version = 11 : i64} {
  func.func @cbm_soft_kernel(%arg0: i32, %arg1: memref<8x32xbf16, #tpu.memory_space<vmem>>, %arg2: memref<32x256xbf16, #tpu.memory_space<vmem>>, %arg3: memref<1x256xf32, #tpu.memory_space<vmem>>, %arg4: memref<256x256xbf16, #tpu.memory_space<vmem>>, %arg5: memref<1x256xf32, #tpu.memory_space<vmem>>, %arg6: memref<256x256xbf16, #tpu.memory_space<vmem>>, %arg7: memref<1x256xf32, #tpu.memory_space<vmem>>, %arg8: memref<256x128xbf16, #tpu.memory_space<vmem>>, %arg9: memref<1x128xf32, #tpu.memory_space<vmem>>, %arg10: memref<8x128xf32, #tpu.memory_space<vmem>>) attributes {dimension_semantics = [#tpu.dimension_semantics<parallel>], iteration_bounds = array<i64: 1>, scalar_prefetch = 0 : i64, scratch_operands = 0 : i64, tpu.core_type = #tpu.core_type<tc>, window_params = [{transform_indices = @transform_0, window_bounds = array<i64: 8, 32>}, {pipeline_mode = #tpu.pipeline_mode<synchronous>, transform_indices = @transform_1, window_bounds = array<i64: 32, 256>}, {pipeline_mode = #tpu.pipeline_mode<synchronous>, transform_indices = @transform_2, window_bounds = array<i64: 1, 256>}, {pipeline_mode = #tpu.pipeline_mode<synchronous>, transform_indices = @transform_3, window_bounds = array<i64: 256, 256>}, {pipeline_mode = #tpu.pipeline_mode<synchronous>, transform_indices = @transform_4, window_bounds = array<i64: 1, 256>}, {pipeline_mode = #tpu.pipeline_mode<synchronous>, transform_indices = @transform_5, window_bounds = array<i64: 256, 256>}, {pipeline_mode = #tpu.pipeline_mode<synchronous>, transform_indices = @transform_6, window_bounds = array<i64: 1, 256>}, {pipeline_mode = #tpu.pipeline_mode<synchronous>, transform_indices = @transform_7, window_bounds = array<i64: 256, 128>}, {pipeline_mode = #tpu.pipeline_mode<synchronous>, transform_indices = @transform_8, window_bounds = array<i64: 1, 128>}, {transform_indices = @transform_9, window_bounds = array<i64: 8, 128>}]} {
    %c0 = arith.constant 0 : index
    %c0_0 = arith.constant 0 : index
    %0 = vector.load %arg1[%c0, %c0_0] : memref<8x32xbf16, #tpu.memory_space<vmem>>, vector<8x32xbf16>
    %c0_1 = arith.constant 0 : index
    %c0_2 = arith.constant 0 : index
    %1 = vector.load %arg2[%c0_1, %c0_2] : memref<32x256xbf16, #tpu.memory_space<vmem>>, vector<32x256xbf16>
    %cst = arith.constant dense<0.000000e+00> : vector<8x256xf32>
    %2 = tpu.matmul %0, %1, %cst {dimension_numbers = #tpu.dot_dimension_numbers<[1], [0], [0], [1], [0, 0, 1, 1], [], []>} : vector<8x32xbf16>, vector<32x256xbf16>, vector<8x256xf32> -> vector<8x256xf32>
    %c0_3 = arith.constant 0 : index
    %c0_4 = arith.constant 0 : index
    %3 = vector.load %arg3[%c0_3, %c0_4] : memref<1x256xf32, #tpu.memory_space<vmem>>, vector<1x256xf32>
    %4 = vector.broadcast %3 : vector<1x256xf32> to vector<8x256xf32>
    %5 = arith.addf %2, %4 : vector<8x256xf32>
    %cst_5 = arith.constant 0.000000e+00 : f32
    %6 = vector.broadcast %cst_5 : f32 to vector<8x256xf32>
    %7 = arith.maximumf %5, %6 : vector<8x256xf32>
    %8 = arith.truncf %7 : vector<8x256xf32> to vector<8x256xbf16>
    %c0_6 = arith.constant 0 : index
    %c0_7 = arith.constant 0 : index
    %9 = vector.load %arg4[%c0_6, %c0_7] : memref<256x256xbf16, #tpu.memory_space<vmem>>, vector<256x256xbf16>
    %cst_8 = arith.constant dense<0.000000e+00> : vector<8x256xf32>
    %10 = tpu.matmul %8, %9, %cst_8 {dimension_numbers = #tpu.dot_dimension_numbers<[1], [0], [0], [1], [0, 0, 1, 1], [], []>} : vector<8x256xbf16>, vector<256x256xbf16>, vector<8x256xf32> -> vector<8x256xf32>
    %c0_9 = arith.constant 0 : index
    %c0_10 = arith.constant 0 : index
    %11 = vector.load %arg5[%c0_9, %c0_10] : memref<1x256xf32, #tpu.memory_space<vmem>>, vector<1x256xf32>
    %12 = vector.broadcast %11 : vector<1x256xf32> to vector<8x256xf32>
    %13 = arith.addf %10, %12 : vector<8x256xf32>
    %cst_11 = arith.constant 0.000000e+00 : f32
    %14 = vector.broadcast %cst_11 : f32 to vector<8x256xf32>
    %15 = arith.maximumf %13, %14 : vector<8x256xf32>
    %16 = arith.truncf %15 : vector<8x256xf32> to vector<8x256xbf16>
    %c0_12 = arith.constant 0 : index
    %c0_13 = arith.constant 0 : index
    %17 = vector.load %arg6[%c0_12, %c0_13] : memref<256x256xbf16, #tpu.memory_space<vmem>>, vector<256x256xbf16>
    %cst_14 = arith.constant dense<0.000000e+00> : vector<8x256xf32>
    %18 = tpu.matmul %16, %17, %cst_14 {dimension_numbers = #tpu.dot_dimension_numbers<[1], [0], [0], [1], [0, 0, 1, 1], [], []>} : vector<8x256xbf16>, vector<256x256xbf16>, vector<8x256xf32> -> vector<8x256xf32>
    %c0_15 = arith.constant 0 : index
    %c0_16 = arith.constant 0 : index
    %19 = vector.load %arg7[%c0_15, %c0_16] : memref<1x256xf32, #tpu.memory_space<vmem>>, vector<1x256xf32>
    %20 = vector.broadcast %19 : vector<1x256xf32> to vector<8x256xf32>
    %21 = arith.addf %18, %20 : vector<8x256xf32>
    %cst_17 = arith.constant 0.000000e+00 : f32
    %22 = vector.broadcast %cst_17 : f32 to vector<8x256xf32>
    %23 = arith.maximumf %21, %22 : vector<8x256xf32>
    %24 = arith.truncf %23 : vector<8x256xf32> to vector<8x256xbf16>
    %c0_18 = arith.constant 0 : index
    %c0_19 = arith.constant 0 : index
    %25 = vector.load %arg8[%c0_18, %c0_19] : memref<256x128xbf16, #tpu.memory_space<vmem>>, vector<256x128xbf16>
    %cst_20 = arith.constant dense<0.000000e+00> : vector<8x128xf32>
    %26 = tpu.matmul %24, %25, %cst_20 {dimension_numbers = #tpu.dot_dimension_numbers<[1], [0], [0], [1], [0, 0, 1, 1], [], []>} : vector<8x256xbf16>, vector<256x128xbf16>, vector<8x128xf32> -> vector<8x128xf32>
    %c0_21 = arith.constant 0 : index
    %c0_22 = arith.constant 0 : index
    %27 = vector.load %arg9[%c0_21, %c0_22] : memref<1x128xf32, #tpu.memory_space<vmem>>, vector<1x128xf32>
    %28 = vector.broadcast %27 : vector<1x128xf32> to vector<8x128xf32>
    %29 = arith.addf %26, %28 : vector<8x128xf32>
    %30 = tpu.iota {dimensions = array<i32: 1>} : vector<8x128xi32>
    %c8_i32 = arith.constant 8 : i32
    %31 = vector.broadcast %c8_i32 : i32 to vector<8x128xi32>
    %32 = arith.cmpi slt, %30, %31 : vector<8x128xi32>
    %33 = arith.negf %29 : vector<8x128xf32>
    %34 = math.exp %33 : vector<8x128xf32>
    %cst_23 = arith.constant 1.000000e+00 : f32
    %35 = vector.broadcast %cst_23 : f32 to vector<8x128xf32>
    %36 = arith.addf %35, %34 : vector<8x128xf32>
    %37 = arith.divf %35, %36 : vector<8x128xf32>
    %38 = arith.select %32, %37, %29 : vector<8x128xi1>, vector<8x128xf32>
    %c0_24 = arith.constant 0 : index
    %c0_25 = arith.constant 0 : index
    %39 = vector.load %arg10[%c0_24, %c0_25] : memref<8x128xf32, #tpu.memory_space<vmem>>, vector<8x128xf32>
    tpu.vector_store %arg10[%c0_24, %c0_25], %38 {strides = array<i32>} : memref<8x128xf32, #tpu.memory_space<vmem>>, vector<8x128xf32>,
    return
  }
  func.func @transform_0(%arg0: i32) -> (i32, i32) {
    %c0_i32 = arith.constant 0 : i32
    %c0_i32_0 = arith.constant 0 : i32
    return %arg0, %c0_i32 : i32, i32
  }
  func.func @transform_1(%arg0: i32) -> (i32, i32) {
    %c0_i32 = arith.constant 0 : i32
    %c0_i32_0 = arith.constant 0 : i32
    %c0_i32_1 = arith.constant 0 : i32
    return %c0_i32, %c0_i32_0 : i32, i32
  }
  func.func @transform_2(%arg0: i32) -> (i32, i32) {
    %c0_i32 = arith.constant 0 : i32
    %c0_i32_0 = arith.constant 0 : i32
    %c0_i32_1 = arith.constant 0 : i32
    return %c0_i32, %c0_i32_0 : i32, i32
  }
  func.func @transform_3(%arg0: i32) -> (i32, i32) {
    %c0_i32 = arith.constant 0 : i32
    %c0_i32_0 = arith.constant 0 : i32
    %c0_i32_1 = arith.constant 0 : i32
    return %c0_i32, %c0_i32_0 : i32, i32
  }
  func.func @transform_4(%arg0: i32) -> (i32, i32) {
    %c0_i32 = arith.constant 0 : i32
    %c0_i32_0 = arith.constant 0 : i32
    %c0_i32_1 = arith.constant 0 : i32
    return %c0_i32, %c0_i32_0 : i32, i32
  }
  func.func @transform_5(%arg0: i32) -> (i32, i32) {
    %c0_i32 = arith.constant 0 : i32
    %c0_i32_0 = arith.constant 0 : i32
    %c0_i32_1 = arith.constant 0 : i32
    return %c0_i32, %c0_i32_0 : i32, i32
  }
  func.func @transform_6(%arg0: i32) -> (i32, i32) {
    %c0_i32 = arith.constant 0 : i32
    %c0_i32_0 = arith.constant 0 : i32
    %c0_i32_1 = arith.constant 0 : i32
    return %c0_i32, %c0_i32_0 : i32, i32
  }
  func.func @transform_7(%arg0: i32) -> (i32, i32) {
    %c0_i32 = arith.constant 0 : i32
    %c0_i32_0 = arith.constant 0 : i32
    %c0_i32_1 = arith.constant 0 : i32
    return %c0_i32, %c0_i32_0 : i32, i32
  }
  func.func @transform_8(%arg0: i32) -> (i32, i32) {
    %c0_i32 = arith.constant 0 : i32
    %c0_i32_0 = arith.constant 0 : i32
    %c0_i32_1 = arith.constant 0 : i32
    return %c0_i32, %c0_i32_0 : i32, i32
  }
  func.func @transform_9(%arg0: i32) -> (i32, i32) {
    %c0_i32 = arith.constant 0 : i32
    %c0_i32_0 = arith.constant 0 : i32
    return %arg0, %c0_i32 : i32, i32
  }
}

</mosaic_0001>

<llo_original>
// kernel: cbm_forward.1
$region0: #{cbm_forward.1}
  #allocation0 [shape = 'u32[]', space=smem, size = 0x4, offset = 0x4, fixed_abs, tag = 'smem constant byte address 0x4 - core index']
  #allocation1 [shape = 'u32[144,128]{1,0:T(1,128)}', space=vmem, size = 0x12000, scoped, tag = 'internal scratch']
  %s0 = inlined_call_operand.vmem [shape: bf16[8,32], index: 0, kind: input, shape index: {}]
  %s1 = inlined_call_operand.vmem [shape: bf16[32,256], index: 1, kind: input, shape index: {}]
  %s2 = inlined_call_operand.vmem [shape: f32[1,256], index: 2, kind: input, shape index: {}]
  %s3 = inlined_call_operand.vmem [shape: bf16[256,256], index: 3, kind: input, shape index: {}]
  %s4 = inlined_call_operand.vmem [shape: f32[1,256], index: 4, kind: input, shape index: {}]
  %s5 = inlined_call_operand.vmem [shape: bf16[256,256], index: 5, kind: input, shape index: {}]
  %s6 = inlined_call_operand.vmem [shape: f32[1,256], index: 6, kind: input, shape index: {}]
  %s7 = inlined_call_operand.vmem [shape: bf16[256,128], index: 7, kind: input, shape index: {}]
  %s8 = inlined_call_operand.vmem [shape: f32[1,128], index: 8, kind: input, shape index: {}]
  %s9 = inlined_call_operand.vmem [shape: f32[8,128], index: 9, kind: output, shape index: {}]
  %s10 = sld [smem:[#allocation0]]
  $region46: #{cbm_forward.1} parent=0
    _
  %s12 = ssub.s32 1, %s10
  %s13 = scalar_select 0, %s12, %s10
  // Predicated region
  $region2: #{cbm_forward.1} parent=0 // pred_check
    _
  $region3: #{cbm_forward.1} parent=0 // pred_check_branch
    %15 = sbr.rel (0) target = $region5
  $region4: #{cbm_forward.1} parent=0 // pred_region
    _
  $region5: #{cbm_forward.1} parent=0 // pred_fallthru
    _
  // Predicated region
  $region6: #{cbm_forward.1} parent=0 // pred_check
    _
  $region7: #{cbm_forward.1} parent=0 // pred_check_branch
    %17 = sbr.rel (0) target = $region9
  $region8: #{cbm_forward.1} parent=0 // pred_region
    _
  $region9: #{cbm_forward.1} parent=0 // pred_fallthru
    _
  // Predicated region
  $region10: #{cbm_forward.1} parent=0 // pred_check
    _
  $region11: #{cbm_forward.1} parent=0 // pred_check_branch
    %19 = sbr.rel (0) target = $region13
  $region12: #{cbm_forward.1} parent=0 // pred_region
    _
  $region13: #{cbm_forward.1} parent=0 // pred_fallthru
    _
  // Predicated region
  $region14: #{cbm_forward.1} parent=0 // pred_check
    _
  $region15: #{cbm_forward.1} parent=0 // pred_check_branch
    %21 = sbr.rel (0) target = $region17
  $region16: #{cbm_forward.1} parent=0 // pred_region
    _
  $region17: #{cbm_forward.1} parent=0 // pred_fallthru
    _
  // Predicated region
  $region18: #{cbm_forward.1} parent=0 // pred_check
    _
  $region19: #{cbm_forward.1} parent=0 // pred_check_branch
    %23 = sbr.rel (0) target = $region21
  $region20: #{cbm_forward.1} parent=0 // pred_region
    _
  $region21: #{cbm_forward.1} parent=0 // pred_fallthru
    _
  // Predicated region
  $region22: #{cbm_forward.1} parent=0 // pred_check
    _
  $region23: #{cbm_forward.1} parent=0 // pred_check_branch
    %25 = sbr.rel (0) target = $region25
  $region24: #{cbm_forward.1} parent=0 // pred_region
    _
  $region25: #{cbm_forward.1} parent=0 // pred_fallthru
    _
  // Predicated region
  $region26: #{cbm_forward.1} parent=0 // pred_check
    _
  $region27: #{cbm_forward.1} parent=0 // pred_check_branch
    %27 = sbr.rel (0) target = $region29
  $region28: #{cbm_forward.1} parent=0 // pred_region
    _
  $region29: #{cbm_forward.1} parent=0 // pred_fallthru
    _
  // Predicated region
  $region30: #{cbm_forward.1} parent=0 // pred_check
    _
  $region31: #{cbm_forward.1} parent=0 // pred_check_branch
    %29 = sbr.rel (0) target = $region33
  $region32: #{cbm_forward.1} parent=0 // pred_region
    _
  $region33: #{cbm_forward.1} parent=0 // pred_fallthru
    _
  // Predicated region
  $region34: #{cbm_forward.1} parent=0 // pred_check
    _
  $region35: #{cbm_forward.1} parent=0 // pred_check_branch
    %31 = sbr.rel (0) target = $region37
  $region36: #{cbm_forward.1} parent=0 // pred_region
    _
  $region37: #{cbm_forward.1} parent=0 // pred_fallthru
    _
  %v33 = vld [vmem:[%s0] sm:$0xf]
  %v34 = vld [vmem:[%s1] sm:$0xff]
  %v35 = vld [vmem:[%s1 + $0x8] sm:$0xff]
  %v36 = vld [vmem:[%s1 + $0x10] sm:$0xff]
  %v37 = vld [vmem:[%s1 + $0x18] sm:$0xff]
  %v38 = vld [vmem:[%s2] sm:$0x3]
  %v40 = vlaneseq
  %v41 = vshrl.u32 %v40, 7
  %v42 = vsub.s32 0, %v41
  %v43 = vrot.slane %v38, %v42
  %v44 = vlaneseq
  %v45 = vshrl.u32 %v44, 7
  %v46 = vsub.s32 1, %v45
  %v47 = vrot.slane %v38, %v46
  %v54 = vunpack.c.l.b16 %v34
  %v55 = vunpack.c.h.b16 %v34
  %v56 = vunpack.c.l.b16 %v35
  %v57 = vunpack.c.h.b16 %v35
  %v58 = vunpack.c.l.b16 %v36
  %v59 = vunpack.c.h.b16 %v36
  %v60 = vunpack.c.l.b16 %v37
  %v61 = vunpack.c.h.b16 %v37
  %v62 = vpack.c.b16 %v56, %v54
  %v63 = vpack.c.b16 %v57, %v55
  %v64 = vpack.c.b16 %v60, %v58
  %v65 = vpack.c.b16 %v61, %v59
  %vm70 = vcmask 261120
  %v72 = vsel %vm70, %v33, 0
  %74 = vmatprep.subr.bf16.mxu0 %v63
  %75 = vmatpush1.bf16.msra.mxu0 %v62
  %76 = vmatprep.subr.bf16.mxu0 %v65
  %77 = vmatpush1.bf16.msra.mxu0 %v64
  %78 = vmatprep.subr.bf16.mxu0 0
  %79 = vmatpush1.bf16.msra.mxu0 0
  %80 = vmatprep.subr.bf16.mxu0 0
  %81 = vmatpush1.bf16.msra.mxu0 0
  %82 = vmatprep.subr.bf16.mxu0 0
  %83 = vmatpush1.bf16.msra.mxu0 0
  %84 = vmatprep.subr.bf16.mxu0 0
  %85 = vmatpush1.bf16.msra.mxu0 0
  %86 = vmatprep.subr.bf16.mxu0 0
  %87 = vmatpush1.bf16.msra.mxu0 0
  %88 = vmatprep.subr.bf16.mxu0 0
  %89 = vmatpush1.bf16.msra.mxu0 0
  %90 = vmatprep.subr.bf16.mxu0 0
  %91 = vmatpush1.bf16.msra.mxu0 0
  %92 = vmatprep.subr.bf16.mxu0 0
  %93 = vmatpush1.bf16.msra.mxu0 0
  %94 = vmatprep.subr.bf16.mxu0 0
  %95 = vmatpush1.bf16.msra.mxu0 0
  %96 = vmatprep.subr.bf16.mxu0 0
  %97 = vmatpush1.bf16.msra.mxu0 0
  %98 = vmatprep.subr.bf16.mxu0 0
  %99 = vmatpush1.bf16.msra.mxu0 0
  %100 = vmatprep.subr.bf16.mxu0 0
  %101 = vmatpush1.bf16.msra.mxu0 0
  %102 = vmatprep.subr.bf16.mxu0 0
  %103 = vmatpush1.bf16.msra.mxu0 0
  %104 = vmatprep.subr.bf16.mxu0 0
  %105 = vmatpush1.bf16.msra.mxu0 0
  %106 = vmatprep.mubr.bf16.mxu0 0
  %107 = vmatmul.mubr.bf16.gmra.mrb[0].mxu0 %v72
  %v108 = vpop.f32.mrb[0].mxu0
  %v109 = vadd.f32 %v43, %v108
  %v110 = vpop.f32.mrb[0].mxu0
  %v111 = vadd.f32 %v47, %v110
  %v112 = vpop.f32.mrb[0].mxu0
  %v113 = vpop.f32.mrb[0].mxu0
  %114 = vdwg.mxu0
  %v115 = vmax.f32 %v109, 0.0
  %v116 = vmax.f32 %v111, 0.0
  %v117 = vpack.c.bf16 %v115, %v115
  %v118 = vpack.c.bf16 %v116, %v116
  %v119 = vld [vmem:[%s3] sm:$0xff]
  %v120 = vld [vmem:[%s3 + $0x8] sm:$0xff]
  %v121 = vld [vmem:[%s3 + $0x10] sm:$0xff]
  %v122 = vld [vmem:[%s3 + $0x18] sm:$0xff]
  %v123 = vld [vmem:[%s3 + $0x20] sm:$0xff]
  %v124 = vld [vmem:[%s3 + $0x28] sm:$0xff]
  %v125 = vld [vmem:[%s3 + $0x30] sm:$0xff]
  %v126 = vld [vmem:[%s3 + $0x38] sm:$0xff]
  %v127 = vld [vmem:[%s3 + $0x40] sm:$0xff]
  %v128 = vld [vmem:[%s3 + $0x48] sm:$0xff]
  %v129 = vld [vmem:[%s3 + $0x50] sm:$0xff]
  %v130 = vld [vmem:[%s3 + $0x58] sm:$0xff]
  %v131 = vld [vmem:[%s3 + $0x60] sm:$0xff]
  %v132 = vld [vmem:[%s3 + $0x68] sm:$0xff]
  %v133 = vld [vmem:[%s3 + $0x70] sm:$0xff]
  %v134 = vld [vmem:[%s3 + $0x78] sm:$0xff]
  %v135 = vld [vmem:[%s3 + $0x80] sm:$0xff]
  %v136 = vld [vmem:[%s3 + $0x88] sm:$0xff]
  %v137 = vld [vmem:[%s3 + $0x90] sm:$0xff]
  %v138 = vld [vmem:[%s3 + $0x98] sm:$0xff]
  %v139 = vld [vmem:[%s3 + $0xa0] sm:$0xff]
  %v140 = vld [vmem:[%s3 + $0xa8] sm:$0xff]
  %v141 = vld [vmem:[%s3 + $0xb0] sm:$0xff]
  %v142 = vld [vmem:[%s3 + $0xb8] sm:$0xff]
  %v143 = vld [vmem:[%s3 + $0xc0] sm:$0xff]
  %v144 = vld [vmem:[%s3 + $0xc8] sm:$0xff]
  %v145 = vld [vmem:[%s3 + $0xd0] sm:$0xff]
  %v146 = vld [vmem:[%s3 + $0xd8] sm:$0xff]
  %v147 = vld [vmem:[%s3 + $0xe0] sm:$0xff]
  %v148 = vld [vmem:[%s3 + $0xe8] sm:$0xff]
  %v149 = vld [vmem:[%s3 + $0xf0] sm:$0xff]
  %v150 = vld [vmem:[%s3 + $0xf8] sm:$0xff]
  %v151 = vld [vmem:[%s4] sm:$0x3]
  %v153 = vlaneseq
  %v154 = vshrl.u32 %v153, 7
  %v155 = vsub.s32 0, %v154
  %v156 = vrot.slane %v151, %v155
  %v157 = vlaneseq
  %v158 = vshrl.u32 %v157, 7
  %v159 = vsub.s32 1, %v158
  %v160 = vrot.slane %v151, %v159
  %v195 = vunpack.c.l.b16 %v119
  %v196 = vunpack.c.h.b16 %v119
  %v197 = vunpack.c.l.b16 %v120
  %v198 = vunpack.c.h.b16 %v120
  %v199 = vunpack.c.l.b16 %v121
  %v200 = vunpack.c.h.b16 %v121
  %v201 = vunpack.c.l.b16 %v122
  %v202 = vunpack.c.h.b16 %v122
  %v203 = vunpack.c.l.b16 %v123
  %v204 = vunpack.c.h.b16 %v123
  %v205 = vunpack.c.l.b16 %v124
  %v206 = vunpack.c.h.b16 %v124
  %v207 = vunpack.c.l.b16 %v125
  %v208 = vunpack.c.h.b16 %v125
  %v209 = vunpack.c.l.b16 %v126
  %v210 = vunpack.c.h.b16 %v126
  %v211 = vunpack.c.l.b16 %v127
  %v212 = vunpack.c.h.b16 %v127
  %v213 = vunpack.c.l.b16 %v128
  %v214 = vunpack.c.h.b16 %v128
  %v215 = vunpack.c.l.b16 %v129
  %v216 = vunpack.c.h.b16 %v129
  %v217 = vunpack.c.l.b16 %v130
  %v218 = vunpack.c.h.b16 %v130
  %v219 = vunpack.c.l.b16 %v131
  %v220 = vunpack.c.h.b16 %v131
  %v221 = vunpack.c.l.b16 %v132
  %v222 = vunpack.c.h.b16 %v132
  %v223 = vunpack.c.l.b16 %v133
  %v224 = vunpack.c.h.b16 %v133
  %v225 = vunpack.c.l.b16 %v134
  %v226 = vunpack.c.h.b16 %v134
  %v227 = vunpack.c.l.b16 %v135
  %v228 = vunpack.c.h.b16 %v135
  %v229 = vunpack.c.l.b16 %v136
  %v230 = vunpack.c.h.b16 %v136
  %v231 = vunpack.c.l.b16 %v137
  %v232 = vunpack.c.h.b16 %v137
  %v233 = vunpack.c.l.b16 %v138
  %v234 = vunpack.c.h.b16 %v138
  %v235 = vunpack.c.l.b16 %v139
  %v236 = vunpack.c.h.b16 %v139
  %v237 = vunpack.c.l.b16 %v140
  %v238 = vunpack.c.h.b16 %v140
  %v239 = vunpack.c.l.b16 %v141
  %v240 = vunpack.c.h.b16 %v141
  %v241 = vunpack.c.l.b16 %v142
  %v242 = vunpack.c.h.b16 %v142
  %v243 = vunpack.c.l.b16 %v143
  %v244 = vunpack.c.h.b16 %v143
  %v245 = vunpack.c.l.b16 %v144
  %v246 = vunpack.c.h.b16 %v144
  %v247 = vunpack.c.l.b16 %v145
  %v248 = vunpack.c.h.b16 %v145
  %v249 = vunpack.c.l.b16 %v146
  %v250 = vunpack.c.h.b16 %v146
  %v251 = vunpack.c.l.b16 %v147
  %v252 = vunpack.c.h.b16 %v147
  %v253 = vunpack.c.l.b16 %v148
  %v254 = vunpack.c.h.b16 %v148
  %v255 = vunpack.c.l.b16 %v149
  %v256 = vunpack.c.h.b16 %v149
  %v257 = vunpack.c.l.b16 %v150
  %v258 = vunpack.c.h.b16 %v150
  %v259 = vpack.c.b16 %v197, %v195
  %v260 = vpack.c.b16 %v198, %v196
  %v261 = vpack.c.b16 %v201, %v199
  %v262 = vpack.c.b16 %v202, %v200
  %v263 = vpack.c.b16 %v205, %v203
  %v264 = vpack.c.b16 %v206, %v204
  %v265 = vpack.c.b16 %v209, %v207
  %v266 = vpack.c.b16 %v210, %v208
  %v267 = vpack.c.b16 %v213, %v211
  %v268 = vpack.c.b16 %v214, %v212
  %v269 = vpack.c.b16 %v217, %v215
  %v270 = vpack.c.b16 %v218, %v216
  %v271 = vpack.c.b16 %v221, %v219
  %v272 = vpack.c.b16 %v222, %v220
  %v273 = vpack.c.b16 %v225, %v223
  %v274 = vpack.c.b16 %v226, %v224
  %v275 = vpack.c.b16 %v229, %v227
  %v276 = vpack.c.b16 %v230, %v228
  %v277 = vpack.c.b16 %v233, %v231
  %v278 = vpack.c.b16 %v234, %v232
  %v279 = vpack.c.b16 %v237, %v235
  %v280 = vpack.c.b16 %v238, %v236
  %v281 = vpack.c.b16 %v241, %v239
  %v282 = vpack.c.b16 %v242, %v240
  %v283 = vpack.c.b16 %v245, %v243
  %v284 = vpack.c.b16 %v246, %v244
  %v285 = vpack.c.b16 %v249, %v247
  %v286 = vpack.c.b16 %v250, %v248
  %v287 = vpack.c.b16 %v253, %v251
  %v288 = vpack.c.b16 %v254, %v252
  %v289 = vpack.c.b16 %v257, %v255
  %v290 = vpack.c.b16 %v258, %v256
  %323 = vmatprep.subr.bf16.mxu0 %v260
  %324 = vmatpush1.bf16.msra.mxu0 %v259
  %325 = vmatprep.subr.bf16.mxu0 %v262
  %326 = vmatpush1.bf16.msra.mxu0 %v261
  %327 = vmatprep.subr.bf16.mxu0 %v264
  %328 = vmatpush1.bf16.msra.mxu0 %v263
  %329 = vmatprep.subr.bf16.mxu0 %v266
  %330 = vmatpush1.bf16.msra.mxu0 %v265
  %331 = vmatprep.subr.bf16.mxu0 %v268
  %332 = vmatpush1.bf16.msra.mxu0 %v267
  %333 = vmatprep.subr.bf16.mxu0 %v270
  %334 = vmatpush1.bf16.msra.mxu0 %v269
  %335 = vmatprep.subr.bf16.mxu0 %v272
  %336 = vmatpush1.bf16.msra.mxu0 %v271
  %337 = vmatprep.subr.bf16.mxu0 %v274
  %338 = vmatpush1.bf16.msra.mxu0 %v273
  %339 = vmatprep.subr.bf16.mxu0 %v276
  %340 = vmatpush1.bf16.msra.mxu0 %v275
  %341 = vmatprep.subr.bf16.mxu0 %v278
  %342 = vmatpush1.bf16.msra.mxu0 %v277
  %343 = vmatprep.subr.bf16.mxu0 %v280
  %344 = vmatpush1.bf16.msra.mxu0 %v279
  %345 = vmatprep.subr.bf16.mxu0 %v282
  %346 = vmatpush1.bf16.msra.mxu0 %v281
  %347 = vmatprep.subr.bf16.mxu0 %v284
  %348 = vmatpush1.bf16.msra.mxu0 %v283
  %349 = vmatprep.subr.bf16.mxu0 %v286
  %350 = vmatpush1.bf16.msra.mxu0 %v285
  %351 = vmatprep.subr.bf16.mxu0 %v288
  %352 = vmatpush1.bf16.msra.mxu0 %v287
  %353 = vmatprep.subr.bf16.mxu0 %v290
  %354 = vmatpush1.bf16.msra.mxu0 %v289
  %355 = vmatprep.mubr.bf16.mxu0 %v118
  %356 = vmatmul.mubr.bf16.gmra.mrb[0].mxu0 %v117
  %v357 = vpop.f32.mrb[0].mxu0
  %v358 = vadd.f32 %v156, %v357
  %v359 = vpop.f32.mrb[0].mxu0
  %v360 = vadd.f32 %v160, %v359
  %v361 = vpop.f32.mrb[0].mxu0
  %v362 = vpop.f32.mrb[0].mxu0
  %363 = vdwg.mxu0
  %v364 = vmax.f32 %v358, 0.0
  %v365 = vmax.f32 %v360, 0.0
  %v366 = vpack.c.bf16 %v364, %v364
  %v367 = vpack.c.bf16 %v365, %v365
  %v368 = vld [vmem:[%s5] sm:$0xff]
  %v369 = vld [vmem:[%s5 + $0x8] sm:$0xff]
  %v370 = vld [vmem:[%s5 + $0x10] sm:$0xff]
  %v371 = vld [vmem:[%s5 + $0x18] sm:$0xff]
  %v372 = vld [vmem:[%s5 + $0x20] sm:$0xff]
  %v373 = vld [vmem:[%s5 + $0x28] sm:$0xff]
  %v374 = vld [vmem:[%s5 + $0x30] sm:$0xff]
  %v375 = vld [vmem:[%s5 + $0x38] sm:$0xff]
  %v376 = vld [vmem:[%s5 + $0x40] sm:$0xff]
  %v377 = vld [vmem:[%s5 + $0x48] sm:$0xff]
  %v378 = vld [vmem:[%s5 + $0x50] sm:$0xff]
  %v379 = vld [vmem:[%s5 + $0x58] sm:$0xff]
  %v380 = vld [vmem:[%s5 + $0x60] sm:$0xff]
  %v381 = vld [vmem:[%s5 + $0x68] sm:$0xff]
  %v382 = vld [vmem:[%s5 + $0x70] sm:$0xff]
  %v383 = vld [vmem:[%s5 + $0x78] sm:$0xff]
  %v384 = vld [vmem:[%s5 + $0x80] sm:$0xff]
  %v385 = vld [vmem:[%s5 + $0x88] sm:$0xff]
  %v386 = vld [vmem:[%s5 + $0x90] sm:$0xff]
  %v387 = vld [vmem:[%s5 + $0x98] sm:$0xff]
  %v388 = vld [vmem:[%s5 + $0xa0] sm:$0xff]
  %v389 = vld [vmem:[%s5 + $0xa8] sm:$0xff]
  %v390 = vld [vmem:[%s5 + $0xb0] sm:$0xff]
  %v391 = vld [vmem:[%s5 + $0xb8] sm:$0xff]
  %v392 = vld [vmem:[%s5 + $0xc0] sm:$0xff]
  %v393 = vld [vmem:[%s5 + $0xc8] sm:$0xff]
  %v394 = vld [vmem:[%s5 + $0xd0] sm:$0xff]
  %v395 = vld [vmem:[%s5 + $0xd8] sm:$0xff]
  %v396 = vld [vmem:[%s5 + $0xe0] sm:$0xff]
  %v397 = vld [vmem:[%s5 + $0xe8] sm:$0xff]
  %v398 = vld [vmem:[%s5 + $0xf0] sm:$0xff]
  %v399 = vld [vmem:[%s5 + $0xf8] sm:$0xff]
  %v400 = vld [vmem:[%s6] sm:$0x3]
  %v402 = vlaneseq
  %v403 = vshrl.u32 %v402, 7
  %v404 = vsub.s32 0, %v403
  %v405 = vrot.slane %v400, %v404
  %v406 = vlaneseq
  %v407 = vshrl.u32 %v406, 7
  %v408 = vsub.s32 1, %v407
  %v409 = vrot.slane %v400, %v408
  %v444 = vunpack.c.l.b16 %v368
  %v445 = vunpack.c.h.b16 %v368
  %v446 = vunpack.c.l.b16 %v369
  %v447 = vunpack.c.h.b16 %v369
  %v448 = vunpack.c.l.b16 %v370
  %v449 = vunpack.c.h.b16 %v370
  %v450 = vunpack.c.l.b16 %v371
  %v451 = vunpack.c.h.b16 %v371
  %v452 = vunpack.c.l.b16 %v372
  %v453 = vunpack.c.h.b16 %v372
  %v454 = vunpack.c.l.b16 %v373
  %v455 = vunpack.c.h.b16 %v373
  %v456 = vunpack.c.l.b16 %v374
  %v457 = vunpack.c.h.b16 %v374
  %v458 = vunpack.c.l.b16 %v375
  %v459 = vunpack.c.h.b16 %v375
  %v460 = vunpack.c.l.b16 %v376
  %v461 = vunpack.c.h.b16 %v376
  %v462 = vunpack.c.l.b16 %v377
  %v463 = vunpack.c.h.b16 %v377
  %v464 = vunpack.c.l.b16 %v378
  %v465 = vunpack.c.h.b16 %v378
  %v466 = vunpack.c.l.b16 %v379
  %v467 = vunpack.c.h.b16 %v379
  %v468 = vunpack.c.l.b16 %v380
  %v469 = vunpack.c.h.b16 %v380
  %v470 = vunpack.c.l.b16 %v381
  %v471 = vunpack.c.h.b16 %v381
  %v472 = vunpack.c.l.b16 %v382
  %v473 = vunpack.c.h.b16 %v382
  %v474 = vunpack.c.l.b16 %v383
  %v475 = vunpack.c.h.b16 %v383
  %v476 = vunpack.c.l.b16 %v384
  %v477 = vunpack.c.h.b16 %v384
  %v478 = vunpack.c.l.b16 %v385
  %v479 = vunpack.c.h.b16 %v385
  %v480 = vunpack.c.l.b16 %v386
  %v481 = vunpack.c.h.b16 %v386
  %v482 = vunpack.c.l.b16 %v387
  %v483 = vunpack.c.h.b16 %v387
  %v484 = vunpack.c.l.b16 %v388
  %v485 = vunpack.c.h.b16 %v388
  %v486 = vunpack.c.l.b16 %v389
  %v487 = vunpack.c.h.b16 %v389
  %v488 = vunpack.c.l.b16 %v390
  %v489 = vunpack.c.h.b16 %v390
  %v490 = vunpack.c.l.b16 %v391
  %v491 = vunpack.c.h.b16 %v391
  %v492 = vunpack.c.l.b16 %v392
  %v493 = vunpack.c.h.b16 %v392
  %v494 = vunpack.c.l.b16 %v393
  %v495 = vunpack.c.h.b16 %v393
  %v496 = vunpack.c.l.b16 %v394
  %v497 = vunpack.c.h.b16 %v394
  %v498 = vunpack.c.l.b16 %v395
  %v499 = vunpack.c.h.b16 %v395
  %v500 = vunpack.c.l.b16 %v396
  %v501 = vunpack.c.h.b16 %v396
  %v502 = vunpack.c.l.b16 %v397
  %v503 = vunpack.c.h.b16 %v397
  %v504 = vunpack.c.l.b16 %v398
  %v505 = vunpack.c.h.b16 %v398
  %v506 = vunpack.c.l.b16 %v399
  %v507 = vunpack.c.h.b16 %v399
  %v508 = vpack.c.b16 %v446, %v444
  %v509 = vpack.c.b16 %v447, %v445
  %v510 = vpack.c.b16 %v450, %v448
  %v511 = vpack.c.b16 %v451, %v449
  %v512 = vpack.c.b16 %v454, %v452
  %v513 = vpack.c.b16 %v455, %v453
  %v514 = vpack.c.b16 %v458, %v456
  %v515 = vpack.c.b16 %v459, %v457
  %v516 = vpack.c.b16 %v462, %v460
  %v517 = vpack.c.b16 %v463, %v461
  %v518 = vpack.c.b16 %v466, %v464
  %v519 = vpack.c.b16 %v467, %v465
  %v520 = vpack.c.b16 %v470, %v468
  %v521 = vpack.c.b16 %v471, %v469
  %v522 = vpack.c.b16 %v474, %v472
  %v523 = vpack.c.b16 %v475, %v473
  %v524 = vpack.c.b16 %v478, %v476
  %v525 = vpack.c.b16 %v479, %v477
  %v526 = vpack.c.b16 %v482, %v480
  %v527 = vpack.c.b16 %v483, %v481
  %v528 = vpack.c.b16 %v486, %v484
  %v529 = vpack.c.b16 %v487, %v485
  %v530 = vpack.c.b16 %v490, %v488
  %v531 = vpack.c.b16 %v491, %v489
  %v532 = vpack.c.b16 %v494, %v492
  %v533 = vpack.c.b16 %v495, %v493
  %v534 = vpack.c.b16 %v498, %v496
  %v535 = vpack.c.b16 %v499, %v497
  %v536 = vpack.c.b16 %v502, %v500
  %v537 = vpack.c.b16 %v503, %v501
  %v538 = vpack.c.b16 %v506, %v504
  %v539 = vpack.c.b16 %v507, %v505
  %572 = vmatprep.subr.bf16.mxu0 %v509
  %573 = vmatpush1.bf16.msra.mxu0 %v508
  %574 = vmatprep.subr.bf16.mxu0 %v511
  %575 = vmatpush1.bf16.msra.mxu0 %v510
  %576 = vmatprep.subr.bf16.mxu0 %v513
  %577 = vmatpush1.bf16.msra.mxu0 %v512
  %578 = vmatprep.subr.bf16.mxu0 %v515
  %579 = vmatpush1.bf16.msra.mxu0 %v514
  %580 = vmatprep.subr.bf16.mxu0 %v517
  %581 = vmatpush1.bf16.msra.mxu0 %v516
  %582 = vmatprep.subr.bf16.mxu0 %v519
  %583 = vmatpush1.bf16.msra.mxu0 %v518
  %584 = vmatprep.subr.bf16.mxu0 %v521
  %585 = vmatpush1.bf16.msra.mxu0 %v520
  %586 = vmatprep.subr.bf16.mxu0 %v523
  %587 = vmatpush1.bf16.msra.mxu0 %v522
  %588 = vmatprep.subr.bf16.mxu0 %v525
  %589 = vmatpush1.bf16.msra.mxu0 %v524
  %590 = vmatprep.subr.bf16.mxu0 %v527
  %591 = vmatpush1.bf16.msra.mxu0 %v526
  %592 = vmatprep.subr.bf16.mxu0 %v529
  %593 = vmatpush1.bf16.msra.mxu0 %v528
  %594 = vmatprep.subr.bf16.mxu0 %v531
  %595 = vmatpush1.bf16.msra.mxu0 %v530
  %596 = vmatprep.subr.bf16.mxu0 %v533
  %597 = vmatpush1.bf16.msra.mxu0 %v532
  %598 = vmatprep.subr.bf16.mxu0 %v535
  %599 = vmatpush1.bf16.msra.mxu0 %v534
  %600 = vmatprep.subr.bf16.mxu0 %v537
  %601 = vmatpush1.bf16.msra.mxu0 %v536
  %602 = vmatprep.subr.bf16.mxu0 %v539
  %603 = vmatpush1.bf16.msra.mxu0 %v538
  %604 = vmatprep.mubr.bf16.mxu0 %v367
  %605 = vmatmul.mubr.bf16.gmra.mrb[0].mxu0 %v366
  %v606 = vpop.f32.mrb[0].mxu0
  %v607 = vadd.f32 %v405, %v606
  %v608 = vpop.f32.mrb[0].mxu0
  %v609 = vadd.f32 %v409, %v608
  %v610 = vpop.f32.mrb[0].mxu0
  %v611 = vpop.f32.mrb[0].mxu0
  %612 = vdwg.mxu0
  %v613 = vmax.f32 %v607, 0.0
  %v614 = vmax.f32 %v609, 0.0
  %v615 = vpack.c.bf16 %v613, %v613
  %v616 = vpack.c.bf16 %v614, %v614
  %v617 = vld [vmem:[%s7] sm:$0xf]
  %v618 = vld [vmem:[%s7 + $0x4] sm:$0xf]
  %v619 = vld [vmem:[%s7 + $0x8] sm:$0xf]
  %v620 = vld [vmem:[%s7 + $0xc] sm:$0xf]
  %v621 = vld [vmem:[%s7 + $0x10] sm:$0xf]
  %v622 = vld [vmem:[%s7 + $0x14] sm:$0xf]
  %v623 = vld [vmem:[%s7 + $0x18] sm:$0xf]
  %v624 = vld [vmem:[%s7 + $0x1c] sm:$0xf]
  %v625 = vld [vmem:[%s7 + $0x20] sm:$0xf]
  %v626 = vld [vmem:[%s7 + $0x24] sm:$0xf]
  %v627 = vld [vmem:[%s7 + $0x28] sm:$0xf]
  %v628 = vld [vmem:[%s7 + $0x2c] sm:$0xf]
  %v629 = vld [vmem:[%s7 + $0x30] sm:$0xf]
  %v630 = vld [vmem:[%s7 + $0x34] sm:$0xf]
  %v631 = vld [vmem:[%s7 + $0x38] sm:$0xf]
  %v632 = vld [vmem:[%s7 + $0x3c] sm:$0xf]
  %v633 = vld [vmem:[%s7 + $0x40] sm:$0xf]
  %v634 = vld [vmem:[%s7 + $0x44] sm:$0xf]
  %v635 = vld [vmem:[%s7 + $0x48] sm:$0xf]
  %v636 = vld [vmem:[%s7 + $0x4c] sm:$0xf]
  %v637 = vld [vmem:[%s7 + $0x50] sm:$0xf]
  %v638 = vld [vmem:[%s7 + $0x54] sm:$0xf]
  %v639 = vld [vmem:[%s7 + $0x58] sm:$0xf]
  %v640 = vld [vmem:[%s7 + $0x5c] sm:$0xf]
  %v641 = vld [vmem:[%s7 + $0x60] sm:$0xf]
  %v642 = vld [vmem:[%s7 + $0x64] sm:$0xf]
  %v643 = vld [vmem:[%s7 + $0x68] sm:$0xf]
  %v644 = vld [vmem:[%s7 + $0x6c] sm:$0xf]
  %v645 = vld [vmem:[%s7 + $0x70] sm:$0xf]
  %v646 = vld [vmem:[%s7 + $0x74] sm:$0xf]
  %v647 = vld [vmem:[%s7 + $0x78] sm:$0xf]
  %v648 = vld [vmem:[%s7 + $0x7c] sm:$0xf]
  %v649 = vld [vmem:[%s8] sm:$0x1]
  %v651 = vlaneseq
  %v652 = vshrl.u32 %v651, 7
  %v653 = vsub.s32 0, %v652
  %v654 = vrot.slane %v649, %v653
  %v688 = vunpack.c.l.b16 %v617
  %v689 = vunpack.c.l.b16 %v618
  %v690 = vunpack.c.l.b16 %v619
  %v691 = vunpack.c.l.b16 %v620
  %v692 = vunpack.c.l.b16 %v621
  %v693 = vunpack.c.l.b16 %v622
  %v694 = vunpack.c.l.b16 %v623
  %v695 = vunpack.c.l.b16 %v624
  %v696 = vunpack.c.l.b16 %v625
  %v697 = vunpack.c.l.b16 %v626
  %v698 = vunpack.c.l.b16 %v627
  %v699 = vunpack.c.l.b16 %v628
  %v700 = vunpack.c.l.b16 %v629
  %v701 = vunpack.c.l.b16 %v630
  %v702 = vunpack.c.l.b16 %v631
  %v703 = vunpack.c.l.b16 %v632
  %v704 = vunpack.c.l.b16 %v633
  %v705 = vunpack.c.l.b16 %v634
  %v706 = vunpack.c.l.b16 %v635
  %v707 = vunpack.c.l.b16 %v636
  %v708 = vunpack.c.l.b16 %v637
  %v709 = vunpack.c.l.b16 %v638
  %v710 = vunpack.c.l.b16 %v639
  %v711 = vunpack.c.l.b16 %v640
  %v712 = vunpack.c.l.b16 %v641
  %v713 = vunpack.c.l.b16 %v642
  %v714 = vunpack.c.l.b16 %v643
  %v715 = vunpack.c.l.b16 %v644
  %v716 = vunpack.c.l.b16 %v645
  %v717 = vunpack.c.l.b16 %v646
  %v718 = vunpack.c.l.b16 %v647
  %v719 = vunpack.c.l.b16 %v648
  %v720 = vpack.c.b16 %v689, %v688
  %v721 = vpack.c.b16 %v691, %v690
  %v722 = vpack.c.b16 %v693, %v692
  %v723 = vpack.c.b16 %v695, %v694
  %v724 = vpack.c.b16 %v697, %v696
  %v725 = vpack.c.b16 %v699, %v698
  %v726 = vpack.c.b16 %v701, %v700
  %v727 = vpack.c.b16 %v703, %v702
  %v728 = vpack.c.b16 %v705, %v704
  %v729 = vpack.c.b16 %v707, %v706
  %v730 = vpack.c.b16 %v709, %v708
  %v731 = vpack.c.b16 %v711, %v710
  %v732 = vpack.c.b16 %v713, %v712
  %v733 = vpack.c.b16 %v715, %v714
  %v734 = vpack.c.b16 %v717, %v716
  %v735 = vpack.c.b16 %v719, %v718
  %752 = vmatprep.subr.bf16.mxu0 0
  %753 = vmatpush1.bf16.msra.mxu0 %v720
  %754 = vmatprep.subr.bf16.mxu0 0
  %755 = vmatpush1.bf16.msra.mxu0 %v721
  %756 = vmatprep.subr.bf16.mxu0 0
  %757 = vmatpush1.bf16.msra.mxu0 %v722
  %758 = vmatprep.subr.bf16.mxu0 0
  %759 = vmatpush1.bf16.msra.mxu0 %v723
  %760 = vmatprep.subr.bf16.mxu0 0
  %761 = vmatpush1.bf16.msra.mxu0 %v724
  %762 = vmatprep.subr.bf16.mxu0 0
  %763 = vmatpush1.bf16.msra.mxu0 %v725
  %764 = vmatprep.subr.bf16.mxu0 0
  %765 = vmatpush1.bf16.msra.mxu0 %v726
  %766 = vmatprep.subr.bf16.mxu0 0
  %767 = vmatpush1.bf16.msra.mxu0 %v727
  %768 = vmatprep.subr.bf16.mxu0 0
  %769 = vmatpush1.bf16.msra.mxu0 %v728
  %770 = vmatprep.subr.bf16.mxu0 0
  %771 = vmatpush1.bf16.msra.mxu0 %v729
  %772 = vmatprep.subr.bf16.mxu0 0
  %773 = vmatpush1.bf16.msra.mxu0 %v730
  %774 = vmatprep.subr.bf16.mxu0 0
  %775 = vmatpush1.bf16.msra.mxu0 %v731
  %776 = vmatprep.subr.bf16.mxu0 0
  %777 = vmatpush1.bf16.msra.mxu0 %v732
  %778 = vmatprep.subr.bf16.mxu0 0
  %779 = vmatpush1.bf16.msra.mxu0 %v733
  %780 = vmatprep.subr.bf16.mxu0 0
  %781 = vmatpush1.bf16.msra.mxu0 %v734
  %782 = vmatprep.subr.bf16.mxu0 0
  %783 = vmatpush1.bf16.msra.mxu0 %v735
  %784 = vmatprep.mubr.bf16.mxu0 %v616
  %785 = vmatmul.mubr.bf16.gmra.mrb[0].mxu0 %v615
  %v786 = vpop.f32.mrb[0].mxu0
  %v787 = vadd.f32 %v654, %v786
  %v788 = vpop.f32.mrb[0].mxu0
  %v789 = vpop.f32.mrb[0].mxu0
  %v790 = vpop.f32.mrb[0].mxu0
  %791 = vdwg.mxu0
  %v792 = vlaneseq
  %v793 = vand.u32 %v792, 127
  %vm794 = vcmp.lt.s32.totalorder %v793, 8
  %v795 = vxor.u32 %v787, 2147483648
  %v796 = vmul.f32 %v795, 1.442695
  %v797 = vpow.pop %v796
  %v798 = vadd.f32 %v797, 1.0
  %v799 = vrcp.pop %v798
  %v800 = vmul.f32 1.0, %v799
  %v801 = vsel %vm794, %v800, %v787
  %802 = vst [vmem:[%s9] sm:$0xff] %v801
  // Predicated region
  $region38: #{cbm_forward.1} parent=0 // pred_check
    _
  $region39: #{cbm_forward.1} parent=0 // pred_check_branch
    %804 = sbr.rel (0) target = $region41
  $region40: #{cbm_forward.1} parent=0 // pred_region
    _
  $region41: #{cbm_forward.1} parent=0 // pred_fallthru
    _
  // Predicated region
  $region42: #{cbm_forward.1} parent=0 // pred_check
    _
  $region43: #{cbm_forward.1} parent=0 // pred_check_branch
    %806 = sbr.rel (0) target = $region45
  $region44: #{cbm_forward.1} parent=0 // pred_region
    _
  $region45: #{cbm_forward.1} parent=0 // pred_fallthru
    _

</llo_original>
